<compile_context>
chip_gen: v7x
topology: tpu7x:2x2x1
jax: 0.10.0
libtpu: 0.0.40
codegen_flags: <defaults>
</compile_context>

<pallas_src>
import functools
import math

import jax
import jax.numpy as jnp
from jax.experimental import pallas as pl
from jax.experimental.pallas import tpu as pltpu


def _round_up(n: int, m: int) -> int:
    return -(-n // m) * m


# --------------------------------------------------------------------------
# Kernels
# --------------------------------------------------------------------------
def _pos_emb_packed_kernel(x_ref, tab_ref, out_ref, *, rows_per: int):
    """Lane-dense path (dim < 128 and 128 % dim == 0).

    x_ref  : (TBR, rows_per) f32 -- rows_per timesteps per 128-lane output row
    tab_ref: (rows_per + 1, 128) f32
             row j (< rows_per): freq_full placed in lanes [j*dim,(j+1)*dim), 0 elsewhere
             row rows_per      : phase row (0 for sin half, pi/2 for cos half), tiled
    out_ref: (TBR, 128) f32 -- fully lane-dense, one unmasked store per vreg
    """
    x = x_ref[...]
    # Expand each timestep into its dim-wide lane segment via masked freq rows.
    # Small static unroll on the (otherwise idle) VPU; no cross-lane relayout.
    emb = x[:, 0:1] * tab_ref[0:1, :]
    for j in range(1, rows_per):
        emb = emb + x[:, j:j + 1] * tab_ref[j:j + 1, :]
    # cos(t) = sin(t + pi/2): single transcendental + ONE full-width store.
    out_ref[...] = jnp.sin(emb + tab_ref[rows_per:rows_per + 1, :])


def _pos_emb_simple_kernel(x_ref, tab_ref, out_ref):
    """Fallback path (dim >= 128 or 128 % dim != 0).

    x_ref  : (TB, 1) f32
    tab_ref: (2, dim) f32 -- row 0 = freqs‖freqs, row 1 = 0‖pi/2
    out_ref: (TB, dim) f32 -- one fused full-width store (no per-half slices)
    """
    out_ref[...] = jnp.sin(x_ref[...] * tab_ref[0:1, :] + tab_ref[1:2, :])


# --------------------------------------------------------------------------
# Wrapper
# --------------------------------------------------------------------------
def _freq_phase(dim: int):
    half = dim // 2
    scale = math.log(10000.0) / (half - 1)
    freqs = jnp.exp(jnp.arange(half, dtype=jnp.float32) * (-scale))
    freq_full = jnp.concatenate([freqs, freqs])                      # (dim,)
    phase_full = jnp.concatenate(
        [jnp.zeros((half,), jnp.float32),
         jnp.full((half,), math.pi / 2, jnp.float32)])               # (dim,)
    return freq_full, phase_full


def _pick_row_tile(total_rows: int, row_bytes: int) -> int:
    """Row tile (multiple of 8), sized by bytes (~2 MiB/output buffer).

    If the whole problem fits in one tile, split into >=2 grid steps only when
    each half is still a decently sized tile (>=256 KiB) so megacore sharding
    helps without paying per-step overhead on tiny tiles.
    """
    r8 = _round_up(max(total_rows, 1), 8)
    target_bytes = 2 * 1024 * 1024
    tb = max(8, (target_bytes // row_bytes) // 8 * 8)
    if tb >= r8:
        half = max(8, (r8 // 2 // 8) * 8)
        if half < r8 and half * row_bytes >= 256 * 1024:
            tb = half
        else:
            tb = r8
    return min(tb, r8)


def sinusoidal_pos_emb(x: jax.Array, dim: int) -> jax.Array:
    """x: (B,) timesteps -> (B, dim) embedding, matching the PyTorch module
    torch.cat((emb.sin(), emb.cos()), dim=-1)."""
    assert dim % 2 == 0, "dim must be even"
    assert dim >= 4, "dim must be >= 4 (half_dim - 1 would be zero otherwise)"
    b = x.shape[0]
    xf = x.astype(jnp.float32)
    freq_full, phase_full = _freq_phase(dim)

    lane_dense = (dim < 128) and (128 % dim == 0)

    if lane_dense:
        rows_per = 128 // dim                       # timesteps per 128-lane row
        b_round = _round_up(b, rows_per)
        if b_round != b:
            xf = jnp.pad(xf, (0, b_round - b))
        n_rows = b_round // rows_per
        x2 = xf.reshape(n_rows, rows_per)           # free row-major reshape

        tbr = _pick_row_tile(n_rows, 128 * 4)
        n_rows_pad = _round_up(n_rows, tbr)
        if n_rows_pad != n_rows:
            x2 = jnp.pad(x2, ((0, n_rows_pad - n_rows), (0, 0)))

        # Table: masked freq rows (one per packed timestep slot) + phase row.
        eye = jnp.eye(rows_per, dtype=jnp.float32)
        freq_rows = (eye[:, :, None] * freq_full[None, None, :]).reshape(rows_per, 128)
        phase_row = jnp.tile(phase_full, rows_per).reshape(1, 128)
        table = jnp.concatenate([freq_rows, phase_row], axis=0)     # (rows_per+1, 128)

        kernel = functools.partial(_pos_emb_packed_kernel, rows_per=rows_per)
        cost = pl.CostEstimate(
            flops=int(2 * n_rows_pad * 128 * rows_per),
            transcendentals=int(n_rows_pad * 128),
            bytes_accessed=int(4 * (n_rows_pad * 128 + n_rows_pad * rows_per
                                    + table.size)),
        )
        out = pl.pallas_call(
            kernel,
            out_shape=jax.ShapeDtypeStruct((n_rows_pad, 128), jnp.float32),
            grid=(n_rows_pad // tbr,),
            in_specs=[
                pl.BlockSpec((tbr, rows_per), lambda i: (i, 0)),     # packed timesteps
                pl.BlockSpec((rows_per + 1, 128), lambda i: (0, 0)), # resident table
            ],
            out_specs=pl.BlockSpec((tbr, 128), lambda i: (i, 0)),
            compiler_params=pltpu.CompilerParams(
                dimension_semantics=("parallel",)),                  # batch tiles independent
            cost_estimate=cost,
        )(x2, table)

        # Contiguous reshape back to (B, dim); padded rows sliced off.
        out = out.reshape(n_rows_pad * rows_per, dim)
        return out[:b]

    # ---------------- fallback: fused full-width store, (B, dim) layout ----
    tb = _pick_row_tile(b, dim * 4)
    b_pad = _round_up(b, tb)
    x2d = xf.reshape(b, 1)
    if b_pad != b:
        x2d = jnp.pad(x2d, ((0, b_pad - b), (0, 0)))
    table = jnp.stack([freq_full, phase_full])                       # (2, dim)

    cost = pl.CostEstimate(
        flops=int(2 * b_pad * dim),
        transcendentals=int(b_pad * dim),
        bytes_accessed=int(4 * (b_pad * dim + b_pad + table.size)),
    )
    out = pl.pallas_call(
        _pos_emb_simple_kernel,
        out_shape=jax.ShapeDtypeStruct((b_pad, dim), jnp.float32),
        grid=(b_pad // tb,),
        in_specs=[
            pl.BlockSpec((tb, 1), lambda i: (i, 0)),
            pl.BlockSpec((2, dim), lambda i: (0, 0)),
        ],
        out_specs=pl.BlockSpec((tb, dim), lambda i: (i, 0)),
        compiler_params=pltpu.CompilerParams(
            dimension_semantics=("parallel",)),
        cost_estimate=cost,
    )(x2d, table)
    return out[:b]


# --------------------------------------------------------------------------
# Reference + self-test
# --------------------------------------------------------------------------
def _reference(x: jax.Array, dim: int) -> jax.Array:
    half = dim // 2
    s = math.log(10000.0) / (half - 1)
    f = jnp.exp(jnp.arange(half, dtype=jnp.float32) * -s)
    e = x.astype(jnp.float32)[:, None] * f[None, :]
    return jnp.concatenate([jnp.sin(e), jnp.cos(e)], axis=-1)


if __name__ == "__main__":
    # cos is computed as sin(t + pi/2); at |t * freq| ~ 1e3 the f32 argument
    # rounding contributes up to ~1e-4 absolute deviation vs. a direct cos,
    # hence the slightly relaxed tolerance below.
    ATOL, RTOL = 5e-4, 1e-4

    def _check(out, ref):
        assert out.shape == ref.shape, (out.shape, ref.shape)
        err = float(jnp.max(jnp.abs(out - ref)))
        assert jnp.allclose(out, ref, atol=ATOL, rtol=RTOL), err

    dim = 32

    # 1) lane-dense packed path (dim=32 divides 128), tiny batch
    x1 = jax.random.uniform(jax.random.PRNGKey(0), (8,), jnp.float32, 0.0, 1000.0)
    o1 = jax.block_until_ready(sinusoidal_pos_emb(x1, dim))
    _check(o1, _reference(x1, dim))

    # 2) packed path with padding (batch not a multiple of 128//dim)
    x2 = jax.random.uniform(jax.random.PRNGKey(1), (50,), jnp.float32, 0.0, 1000.0)
    o2 = jax.block_until_ready(sinusoidal_pos_emb(x2, dim))
    _check(o2, _reference(x2, dim))

    # 3) fallback full-width path (dim=96 does not divide 128)
    x3 = jax.random.uniform(jax.random.PRNGKey(2), (10,), jnp.float32, 0.0, 1000.0)
    o3 = jax.block_until_ready(sinusoidal_pos_emb(x3, 96))
    _check(o3, _reference(x3, 96))

    # 4) multi-grid-step packed path (exercises the >=2-step megacore split)
    x4 = jax.random.uniform(jax.random.PRNGKey(3), (4100,), jnp.float32, 0.0, 1000.0)
    o4 = jax.block_until_ready(sinusoidal_pos_emb(x4, dim))
    _check(o4, _reference(x4, dim))

    print("KERNEL_OK")
</pallas_src>

<mosaic_0001>
module attributes {stable_mosaic.version = 11 : i64} {
  func.func @_pos_emb_packed_kernel(%arg0: i32, %arg1: memref<8x4xf32, #tpu.memory_space<vmem>>, %arg2: memref<5x128xf32, #tpu.memory_space<vmem>>, %arg3: memref<8x128xf32, #tpu.memory_space<vmem>>) attributes {dimension_semantics = [#tpu.dimension_semantics<parallel>], iteration_bounds = array<i64: 1>, scalar_prefetch = 0 : i64, scratch_operands = 0 : i64, tpu.core_type = #tpu.core_type<tc>, window_params = [{transform_indices = @transform_0, window_bounds = array<i64: 8, 4>}, {pipeline_mode = #tpu.pipeline_mode<synchronous>, transform_indices = @transform_1, window_bounds = array<i64: 5, 128>}, {transform_indices = @transform_2, window_bounds = array<i64: 8, 128>}]} {
    %c0 = arith.constant 0 : index
    %c0_0 = arith.constant 0 : index
    %0 = vector.load %arg1[%c0, %c0_0] : memref<8x4xf32, #tpu.memory_space<vmem>>, vector<8x4xf32>
    %1 = vector.extract_strided_slice %0 {offsets = [0, 0], sizes = [8, 1], strides = [1, 1]} : vector<8x4xf32> to vector<8x1xf32>
    %c0_1 = arith.constant 0 : index
    %c0_2 = arith.constant 0 : index
    %2 = vector.load %arg2[%c0_1, %c0_2] : memref<5x128xf32, #tpu.memory_space<vmem>>, vector<1x128xf32>
    %3 = vector.broadcast %1 : vector<8x1xf32> to vector<8x128xf32>
    %4 = vector.broadcast %2 : vector<1x128xf32> to vector<8x128xf32>
    %5 = arith.mulf %3, %4 : vector<8x128xf32>
    %6 = vector.extract_strided_slice %0 {offsets = [0, 1], sizes = [8, 1], strides = [1, 1]} : vector<8x4xf32> to vector<8x1xf32>
    %c1 = arith.constant 1 : index
    %c0_3 = arith.constant 0 : index
    %7 = vector.load %arg2[%c1, %c0_3] : memref<5x128xf32, #tpu.memory_space<vmem>>, vector<1x128xf32>
    %8 = vector.broadcast %6 : vector<8x1xf32> to vector<8x128xf32>
    %9 = vector.broadcast %7 : vector<1x128xf32> to vector<8x128xf32>
    %10 = arith.mulf %8, %9 : vector<8x128xf32>
    %11 = arith.addf %5, %10 : vector<8x128xf32>
    %12 = vector.extract_strided_slice %0 {offsets = [0, 2], sizes = [8, 1], strides = [1, 1]} : vector<8x4xf32> to vector<8x1xf32>
    %c2 = arith.constant 2 : index
    %c0_4 = arith.constant 0 : index
    %13 = vector.load %arg2[%c2, %c0_4] : memref<5x128xf32, #tpu.memory_space<vmem>>, vector<1x128xf32>
    %14 = vector.broadcast %12 : vector<8x1xf32> to vector<8x128xf32>
    %15 = vector.broadcast %13 : vector<1x128xf32> to vector<8x128xf32>
    %16 = arith.mulf %14, %15 : vector<8x128xf32>
    %17 = arith.addf %11, %16 : vector<8x128xf32>
    %18 = vector.extract_strided_slice %0 {offsets = [0, 3], sizes = [8, 1], strides = [1, 1]} : vector<8x4xf32> to vector<8x1xf32>
    %c3 = arith.constant 3 : index
    %c0_5 = arith.constant 0 : index
    %19 = vector.load %arg2[%c3, %c0_5] : memref<5x128xf32, #tpu.memory_space<vmem>>, vector<1x128xf32>
    %20 = vector.broadcast %18 : vector<8x1xf32> to vector<8x128xf32>
    %21 = vector.broadcast %19 : vector<1x128xf32> to vector<8x128xf32>
    %22 = arith.mulf %20, %21 : vector<8x128xf32>
    %23 = arith.addf %17, %22 : vector<8x128xf32>
    %c4 = arith.constant 4 : index
    %c0_6 = arith.constant 0 : index
    %24 = vector.load %arg2[%c4, %c0_6] : memref<5x128xf32, #tpu.memory_space<vmem>>, vector<1x128xf32>
    %25 = vector.broadcast %24 : vector<1x128xf32> to vector<8x128xf32>
    %26 = arith.addf %23, %25 : vector<8x128xf32>
    %27 = math.sin %26 : vector<8x128xf32>
    %c0_7 = arith.constant 0 : index
    %c0_8 = arith.constant 0 : index
    %28 = vector.load %arg3[%c0_7, %c0_8] : memref<8x128xf32, #tpu.memory_space<vmem>>, vector<8x128xf32>
    tpu.vector_store %arg3[%c0_7, %c0_8], %27 {strides = array<i32>} : memref<8x128xf32, #tpu.memory_space<vmem>>, vector<8x128xf32>,
    return
  }
  func.func @transform_0(%arg0: i32) -> (i32, i32) {
    %c0_i32 = arith.constant 0 : i32
    %c0_i32_0 = arith.constant 0 : i32
    return %arg0, %c0_i32 : i32, i32
  }
  func.func @transform_1(%arg0: i32) -> (i32, i32) {
    %c0_i32 = arith.constant 0 : i32
    %c0_i32_0 = arith.constant 0 : i32
    %c0_i32_1 = arith.constant 0 : i32
    return %c0_i32, %c0_i32_0 : i32, i32
  }
  func.func @transform_2(%arg0: i32) -> (i32, i32) {
    %c0_i32 = arith.constant 0 : i32
    %c0_i32_0 = arith.constant 0 : i32
    return %arg0, %c0_i32 : i32, i32
  }
}

</mosaic_0001>

<llo_original>
// kernel: tpu_custom_call.1
$region0: #{tpu_custom_call.1}
  #allocation0 [shape = 'u32[]', space=smem, size = 0x4, offset = 0x4, fixed_abs, tag = 'smem constant byte address 0x4 - core index']
  #allocation1 [shape = 'u32[144,128]{1,0:T(1,128)}', space=vmem, size = 0x12000, scoped, tag = 'internal scratch']
  %s0 = inlined_call_operand.vmem [shape: f32[8,4], index: 0, kind: input, shape index: {}]
  %s1 = inlined_call_operand.vmem [shape: f32[5,128], index: 1, kind: input, shape index: {}]
  %s2 = inlined_call_operand.hbm [shape: f32[8,128], index: 2, kind: output, shape index: {}]
  %s3 = sld [smem:[#allocation0]]
  $region18: #{tpu_custom_call.1} parent=0
    _
  %s5 = ssub.s32 1, %s3
  %s6 = scalar_select 0, %s5, %s3
  $region1: #{tpu_custom_call.1} parent=0
    #allocation2 [shape = 'u8[4096]{0}', space=vmem, size = 0x1000, scoped, tag = 'output window, operand 0, single buffered']
    #allocation3 [shape = 's32[1]{0}', space=sflag, size = 0x4, scoped, tag = 'scoped memory for tpu_custom_call.1']
    %7 = vsyncpa [#allocation3], 0
    // Predicated region
    $region2: #{tpu_custom_call.1} parent=1 // pred_check
      _
    $region3: #{tpu_custom_call.1} parent=1 // pred_check_branch
      %9 = sbr.rel (0) target = $region5
    $region4: #{tpu_custom_call.1} parent=1 // pred_region
      _
    $region5: #{tpu_custom_call.1} parent=1 // pred_fallthru
      _
    // Predicated region
    $region6: #{tpu_custom_call.1} parent=1 // pred_check
      _
    $region7: #{tpu_custom_call.1} parent=1 // pred_check_branch
      %11 = sbr.rel (0) target = $region9
    $region8: #{tpu_custom_call.1} parent=1 // pred_region
      _
    $region9: #{tpu_custom_call.1} parent=1 // pred_fallthru
      _
    %v12 = vld [vmem:[%s0] sm:$0xff]
    %v13 = vld [vmem:[%s1] sm:$0x1]
    %15 = vset.pattern.permute.xlu0 0
    %16 = vperm.xlu0 %15, %v12
    %v17 = vpop.permute.xlu0 %16
    %v19 = vlaneseq
    %v20 = vshrl.u32 %v19, 7
    %v21 = vsub.s32 0, %v20
    %v22 = vrot.slane %v13, %v21
    %v23 = vmul.f32 %v17, %v22
    %v24 = vld [vmem:[%s1 + $0x1] sm:$0x1]
    %25 = vset.pattern.permute.xlu0 1
    %26 = vperm.xlu0 %25, %v12
    %v27 = vpop.permute.xlu0 %26
    %v29 = vlaneseq
    %v30 = vshrl.u32 %v29, 7
    %v31 = vsub.s32 0, %v30
    %v32 = vrot.slane %v24, %v31
    %v33 = vmul.f32 %v27, %v32
    %v34 = vadd.f32 %v23, %v33
    %v35 = vld [vmem:[%s1 + $0x2] sm:$0x1]
    %36 = vset.pattern.permute.xlu0 2
    %37 = vperm.xlu0 %36, %v12
    %v38 = vpop.permute.xlu0 %37
    %v40 = vlaneseq
    %v41 = vshrl.u32 %v40, 7
    %v42 = vsub.s32 0, %v41
    %v43 = vrot.slane %v35, %v42
    %v44 = vmul.f32 %v38, %v43
    %v45 = vadd.f32 %v34, %v44
    %v46 = vld [vmem:[%s1 + $0x3] sm:$0x1]
    %47 = vset.pattern.permute.xlu0 3
    %48 = vperm.xlu0 %47, %v12
    %v49 = vpop.permute.xlu0 %48
    %v51 = vlaneseq
    %v52 = vshrl.u32 %v51, 7
    %v53 = vsub.s32 0, %v52
    %v54 = vrot.slane %v46, %v53
    %v55 = vmul.f32 %v49, %v54
    %v56 = vadd.f32 %v45, %v55
    %v57 = vld [vmem:[%s1 + $0x4] sm:$0x1]
    %v58 = vlaneseq
    %v59 = vshrl.u32 %v58, 7
    %v60 = vsub.s32 0, %v59
    %v61 = vrot.slane %v57, %v60
    %v62 = vadd.f32 %v56, %v61
    %v63 = vand.u32 2147483647, %v62
    %vm64 = vcmp.le.f32.partialorder %v63, 0.7853982
    %vm65 = vcmp.lt.s32.totalorder %v62, 0
    %v66 = vand.u32 %v62, 2139095040
    %v67 = vshrl.u32 %v66, 23
    %v68 = vsub.s32 %v67, 127
    %v69 = vand.u32 2147483647, %v62
    %v70 = vand.u32 %v69, 8388607
    %v71 = vor.u32 %v70, 8388608
    %v72 = vsub.s32 0, %v71
    %v73 = vadd.s32 %v68, 1
    %vm74 = vcmp.gt.s32.totalorder %v73, 0
    %v75 = vsel %vm74, %v73, 0
    %v76 = vshrl.u32 %v75, 5
    %v77 = vand.u32 %v75, 31
    %v78 = vsub.s32 32, %v77
    %v79 = vshrl.u32 683565275, %v78
    %v80 = vshll.u32 683565275, %v77
    %v81 = vshrl.u32 2475754826, %v78
    %v82 = vor.u32 %v80, %v81
    %v83 = vshll.u32 2475754826, %v77
    %v84 = vshrl.u32 2131351028, %v78
    %v85 = vor.u32 %v83, %v84
    %v86 = vshll.u32 2131351028, %v77
    %v87 = vshrl.u32 2102212464, %v78
    %v88 = vor.u32 %v86, %v87
    %v89 = vshll.u32 2102212464, %v77
    %v90 = vshrl.u32 920167782, %v78
    %v91 = vor.u32 %v89, %v90
    %v92 = vshll.u32 920167782, %v77
    %v93 = vshrl.u32 1326507024, %v78
    %v94 = vor.u32 %v92, %v93
    %vm95 = vcmp.lt.s32.totalorder %v76, 1
    %vm96 = vcmp.lt.s32.totalorder %v76, 2
    %vm97 = vcmp.lt.s32.totalorder %v76, 3
    %vm98 = vcmp.lt.s32.totalorder %v76, 4
    %v99 = vsel %vm95, %v79, %v82
    %v100 = vsel %vm98, %v88, 2102212464
    %v101 = vsel %vm97, %v85, %v100
    %v102 = vsel %vm96, %v99, %v101
    %v103 = vsel %vm95, %v82, %v85
    %v104 = vsel %vm98, %v91, 920167782
    %v105 = vsel %vm97, %v88, %v104
    %v106 = vsel %vm96, %v103, %v105
    %v107 = vsel %vm95, %v85, %v88
    %v108 = vsel %vm98, %v94, 1326507024
    %v109 = vsel %vm97, %v91, %v108
    %v110 = vsel %vm96, %v107, %v109
    %v111 = vshll.u32 %v71, 8
    %v112 = vmul.u32.u64.compose %v111, %v110
    %v113 = vextract.low.u32 %v112
    %v114 = vextract.high.u32 %v112
    %v115 = vmul.u32.u64.compose %v111, %v106
    %v116 = vextract.low.u32 %v115
    %v117 = vextract.high.u32 %v115
    %v118 = vmul.u32 %v111, %v102
    %v119 = vadd.s32 %v114, %v116
    %vm120 = vc.u32 %v114, %v116
    %v121 = vadd.s32 %v117, 1
    %v122 = vsel %vm120, %v121, %v117
    %v123 = vadd.s32 %v118, %v122
    %v124 = vadd.s32 %v123, 536870912
    %v125 = vshrl.u32 %v124, 30
    %v126 = vshll.u32 %v125, 30
    %v127 = vsub.s32 %v123, %v126
    %vm128 = vcmp.lt.s32.totalorder %v127, 0
    %v129 = vsub.s32 0, %v127
    %v130 = vsel %vm128, %v129, %v127
    %v131 = vclz %v130
    %v132 = vsub.s32 %v131, 2
    %vm133 = vcmp.gt.s32.totalorder 0, %v132
    %v134 = vsel %vm133, 0, %v132
    %v135 = vsub.s32 32, %v134
    %v136 = vshll.u32 %v127, %v134
    %v137 = vshrl.u32 %v119, %v135
    %v138 = vor.u32 %v136, %v137
    %v139 = vsub.s32 4294967266, %v134
    %v140 = vadd.s32 %v139, 127
    %v141 = vshll.u32 %v140, 23
    %v142 = vor.u32 4788187, %v141
    %v143 = vand.u32 2147483647, %v142
    %v145 = vcvt.s32.f32 %v138
    %v146 = vmul.f32 %v145, %v143
    %v147 = vxor.u32 %v146, 2147483648
    %v148 = vsel %vm65, %v147, %v146
    %v149 = vsub.s32 4, %v125
    %v150 = vsel %vm65, %v149, %v125
    %v151 = vsel %vm64, %v62, %v148
    %v152 = vsel %vm64, 0, %v150
    %v153 = vcosq.f32.pop %v151
    %v154 = vsinq.f32.pop %v151
    %vm155 = vweird.f32 %v62
    %v156 = vadd.s32 %v152, 3
    %v157 = vand.u32 %v156, 3
    %vm158 = vcmp.lt.s32.totalorder %v157, 2
    %vm159 = vcmp.eq.s32.totalorder %v157, 0
    %v160 = vxor.u32 %v154, 2147483648
    %v161 = vsel %vm159, %v153, %v160
    %vm162 = vcmp.eq.s32.totalorder %v157, 2
    %v163 = vxor.u32 %v153, 2147483648
    %v164 = vsel %vm162, %v163, %v154
    %v165 = vsel %vm158, %v161, %v164
    %v166 = vsel %vm155, nan, %v165
    %167 = vst [vmem:[#allocation2] sm:$0xff] %v166
    // Predicated region
    $region10: #{tpu_custom_call.1} parent=1 // pred_check
      _
    $region11: #{tpu_custom_call.1} parent=1 // pred_check_branch
      %169 = sbr.rel (0) target = $region13
    $region12: #{tpu_custom_call.1} parent=1 // pred_region
      %s171 = ssub.s32 128, 128
      %172 = vsyncadd [#allocation3], %s171
      %s174 = sshll.u32 [#allocation2], 4
      %s175 = int_to_ptr.vmem [resolvable:$true] %s174
      %177 = dma.vmem_to_hbm [thread:$0]  %s175, 128, %s2, [#allocation3]
    $region13: #{tpu_custom_call.1} parent=1 // pred_fallthru
      _
    // Predicated region
    $region14: #{tpu_custom_call.1} parent=1 // pred_check
      _
    $region15: #{tpu_custom_call.1} parent=1 // pred_check_branch
      %179 = sbr.rel (0) target = $region17
    $region16: #{tpu_custom_call.1} parent=1 // pred_region
      %180 = dma.done [#allocation3], 128
    $region17: #{tpu_custom_call.1} parent=1 // pred_fallthru
      _
    %181 = vsyncpa [#allocation3], 1

</llo_original>
